<compile_context>
chip_gen: v7x
topology: tpu7x:2x2x1
jax: 0.10.0
libtpu: 0.0.40
codegen_flags: <defaults>
</compile_context>

<pallas_src>
import functools

import jax
import jax.numpy as jnp
from jax.experimental import pallas as pl
from jax.experimental.pallas import tpu as pltpu

_SHIFT = 0.000685
_STRIDE = 5


def _fused_kernel(x_ref, w1_ref, b1_ref, w2_ref, b2_ref, o_ref, *, ho, wo, stride):
    # x_ref : (1, Cin, H, W)      f32 VMEM (raw input; subsample done here)
    # w1_ref: (Cin,)              f32 SMEM scalars (conv1 weight)
    # b1_ref: (1,)                f32 SMEM scalar  (conv1 bias)
    # w2_ref: (Cout, 1, 1)        f32 VMEM         (conv2 weight)
    # b2_ref: (Cout, 1, 1)        f32 VMEM         (conv2 bias)
    # o_ref : (1, Cout, Wo, Ho)   f32 VMEM  == transpose(-1,-2) of conv output
    cin = x_ref.shape[1]
    w_in = x_ref.shape[3]

    # One-hot selection matrix S[w, f] = (f == stride*w).
    # Multiplying a (1, W) row by S and reducing over lanes simultaneously
    # (a) picks every `stride`-th W position and (b) moves the picked values
    # from the lane axis to the sublane axis — i.e. the fused W-subsample +
    # spatial transpose, using only a VPU multiply and an XLU lane-reduce.
    f_idx = jax.lax.broadcasted_iota(jnp.int32, (wo, w_in), 1)
    w_idx = jax.lax.broadcasted_iota(jnp.int32, (wo, w_in), 0)
    sel = jnp.where(f_idx == stride * w_idx, 1.0, 0.0)          # (Wo, W) f32

    w2 = w2_ref[...]                                            # (Cout, 1, 1)
    b2 = b2_ref[...] - jnp.float32(_SHIFT)                      # fold "v2 - 0.000685"
    b1 = b1_ref[0]

    for h in range(ho):                                         # static unroll (Ho = 6)
        # conv1 at input row stride*h, all W positions:
        #   t[0, f] = sum_k w1[k] * x[0, k, stride*h, f] + b1
        t = b1 + w1_ref[0] * x_ref[0, 0, pl.ds(stride * h, 1), :]     # (1, W)
        for k in range(1, cin):
            t = t + w1_ref[k] * x_ref[0, k, pl.ds(stride * h, 1), :]

        # W-subsample + lane->sublane relayout: tw[w, 0] = t[0, stride*w]
        tw = jnp.sum(t * sel, axis=1, keepdims=True)                   # (Wo, 1)

        # conv2 + bias shift + relu, broadcast over the Cout-major axis.
        col = jnp.maximum(w2 * tw[None, :, :] + b2, 0.0)               # (Cout, Wo, 1)

        # Output column h (the transposed layout's minor dim is Ho).
        o_ref[0, :, :, pl.ds(h, 1)] = col


def model_forward(x, w1, b1, w2, b2):
    n, cin, h_in, w_in = x.shape
    assert n == 1, "module is written for batch=1 input"
    stride = _STRIDE
    ho = (h_in - 1) // stride + 1
    wo = (w_in - 1) // stride + 1
    # torch.squeeze(v4, 2) is a no-op only because Ho != 1 (Ho = 6 for 28x28).
    assert ho != 1, "squeeze(dim=2) would drop a dim; fused layout assumes Ho > 1"

    cout = w2.shape[0]

    xf = x.astype(jnp.float32)
    # Bitcast-level reshapes of <128 B parameter tensors (no data movement).
    w1f = w1.reshape(cin).astype(jnp.float32)          # (Cin,)      -> SMEM scalars
    b1f = b1.reshape(1).astype(jnp.float32)            # (1,)        -> SMEM scalar
    w2f = w2.reshape(cout, 1, 1).astype(jnp.float32)   # (Cout,1,1)  -> VMEM
    b2f = b2.reshape(cout, 1, 1).astype(jnp.float32)   # (Cout,1,1)  -> VMEM

    kernel = functools.partial(_fused_kernel, ho=ho, wo=wo, stride=stride)

    flops = 2 * cin * ho * w_in + 2 * cout * wo * ho
    bytes_accessed = 4 * (cin * h_in * w_in + cin + 1 + 2 * cout + cout * wo * ho)

    return pl.pallas_call(
        kernel,
        out_shape=jax.ShapeDtypeStruct((1, cout, wo, ho), jnp.float32),
        in_specs=[
            pl.BlockSpec(memory_space=pltpu.MemorySpace.VMEM),   # x (whole array)
            pl.BlockSpec(memory_space=pltpu.MemorySpace.SMEM),   # w1 scalars
            pl.BlockSpec(memory_space=pltpu.MemorySpace.SMEM),   # b1 scalar
            pl.BlockSpec(memory_space=pltpu.MemorySpace.VMEM),   # w2
            pl.BlockSpec(memory_space=pltpu.MemorySpace.VMEM),   # b2
        ],
        out_specs=pl.BlockSpec(memory_space=pltpu.MemorySpace.VMEM),
        cost_estimate=pl.CostEstimate(
            flops=flops, transcendentals=0, bytes_accessed=bytes_accessed),
    )(xf, w1f, b1f, w2f, b2f)


def _reference(x, w1, b1, w2, b2):
    xs = x[:, :, ::_STRIDE, ::_STRIDE]
    v1 = jnp.einsum('nchw,oc->nohw', xs, w1.reshape(1, 3)) + b1.reshape(1, 1, 1, 1)
    v2 = jnp.einsum('nchw,oc->nohw', v1, w2.reshape(8, 1)) + b2.reshape(1, 8, 1, 1)
    v4 = jnp.maximum(v2 - _SHIFT, 0.0)
    return jnp.swapaxes(v4, -1, -2)


if __name__ == "__main__":
    key = jax.random.PRNGKey(0)
    kx, k1w, k1b, k2w, k2b = jax.random.split(key, 5)

    # Input consistent with the module: (1, 3, 28, 28)
    x = jax.random.normal(kx, (1, 3, 28, 28), dtype=jnp.float32)

    # Deterministic parameter init mimicking PyTorch Conv2d defaults.
    # conv1: Conv2d(3, 1, 1, stride=5) -> weight (1,3,1,1), bias (1,)
    bound1 = 1.0 / jnp.sqrt(3.0)
    w1 = jax.random.uniform(k1w, (1, 3, 1, 1), jnp.float32, -bound1, bound1)
    b1 = jax.random.uniform(k1b, (1,), jnp.float32, -bound1, bound1)
    # conv2: Conv2d(1, 8, 1) -> weight (8,1,1,1), bias (8,)
    bound2 = 1.0
    w2 = jax.random.uniform(k2w, (8, 1, 1, 1), jnp.float32, -bound2, bound2)
    b2 = jax.random.uniform(k2b, (8,), jnp.float32, -bound2, bound2)

    out = jax.jit(model_forward)(x, w1, b1, w2, b2)
    out = jax.block_until_ready(out)
    assert out.shape == (1, 8, 6, 6), out.shape

    ref = jax.block_until_ready(_reference(x, w1, b1, w2, b2))
    assert jnp.allclose(out, ref, atol=1e-5, rtol=1e-5)

    print("KERNEL_OK")
</pallas_src>

<mosaic_0001>
module attributes {stable_mosaic.version = 11 : i64} {
  func.func @_fused_kernel(%arg0: memref<1x3x28x28xf32, #tpu.memory_space<vmem>>, %arg1: memref<3xf32, #tpu.memory_space<smem>>, %arg2: memref<1xf32, #tpu.memory_space<smem>>, %arg3: memref<8x1x1xf32, #tpu.memory_space<vmem>>, %arg4: memref<8x1x1xf32, #tpu.memory_space<vmem>>, %arg5: memref<1x8x6x6xf32, #tpu.memory_space<vmem>>) attributes {dimension_semantics = [], scalar_prefetch = 0 : i64, scratch_operands = 0 : i64, tpu.core_type = #tpu.core_type<tc>} {
    %0 = tpu.iota {dimensions = array<i32: 1>} : vector<6x28xi32>
    %1 = tpu.iota {dimensions = array<i32: 0>} : vector<6x28xi32>
    %c5_i32 = arith.constant 5 : i32
    %2 = vector.broadcast %c5_i32 : i32 to vector<6x28xi32>
    %3 = arith.muli %2, %1 : vector<6x28xi32>
    %4 = arith.cmpi eq, %0, %3 : vector<6x28xi32>
    %cst = arith.constant 1.000000e+00 : f32
    %cst_0 = arith.constant 0.000000e+00 : f32
    %5 = vector.broadcast %cst : f32 to vector<6x28xf32>
    %6 = vector.broadcast %cst_0 : f32 to vector<6x28xf32>
    %7 = arith.select %4, %5, %6 : vector<6x28xi1>, vector<6x28xf32>
    %c0 = arith.constant 0 : index
    %c0_1 = arith.constant 0 : index
    %c0_2 = arith.constant 0 : index
    %8 = vector.load %arg3[%c0, %c0_1, %c0_2] : memref<8x1x1xf32, #tpu.memory_space<vmem>>, vector<8x1x1xf32>
    %c0_3 = arith.constant 0 : index
    %c0_4 = arith.constant 0 : index
    %c0_5 = arith.constant 0 : index
    %9 = vector.load %arg4[%c0_3, %c0_4, %c0_5] : memref<8x1x1xf32, #tpu.memory_space<vmem>>, vector<8x1x1xf32>
    %cst_6 = arith.constant 6.84999977E-4 : f32
    %10 = vector.broadcast %cst_6 : f32 to vector<8x1x1xf32>
    %11 = arith.subf %9, %10 : vector<8x1x1xf32>
    %c0_7 = arith.constant 0 : index
    %12 = memref.load %arg2[%c0_7] : memref<1xf32, #tpu.memory_space<smem>>
    %c0_8 = arith.constant 0 : index
    %13 = memref.load %arg1[%c0_8] : memref<3xf32, #tpu.memory_space<smem>>
    %c0_9 = arith.constant 0 : index
    %c0_10 = arith.constant 0 : index
    %c0_11 = arith.constant 0 : index
    %c0_12 = arith.constant 0 : index
    %14 = vector.load %arg0[%c0_9, %c0_10, %c0_11, %c0_12] : memref<1x3x28x28xf32, #tpu.memory_space<vmem>>, vector<1x1x1x28xf32>
    %15 = vector.shape_cast %14 : vector<1x1x1x28xf32> to vector<1x28xf32>
    %16 = vector.broadcast %13 : f32 to vector<1x28xf32>
    %17 = arith.mulf %16, %15 : vector<1x28xf32>
    %18 = vector.broadcast %12 : f32 to vector<1x28xf32>
    %19 = arith.addf %18, %17 : vector<1x28xf32>
    %c1 = arith.constant 1 : index
    %20 = memref.load %arg1[%c1] : memref<3xf32, #tpu.memory_space<smem>>
    %c0_13 = arith.constant 0 : index
    %c1_14 = arith.constant 1 : index
    %c0_15 = arith.constant 0 : index
    %c0_16 = arith.constant 0 : index
    %21 = vector.load %arg0[%c0_13, %c1_14, %c0_15, %c0_16] : memref<1x3x28x28xf32, #tpu.memory_space<vmem>>, vector<1x1x1x28xf32>
    %22 = vector.shape_cast %21 : vector<1x1x1x28xf32> to vector<1x28xf32>
    %23 = vector.broadcast %20 : f32 to vector<1x28xf32>
    %24 = arith.mulf %23, %22 : vector<1x28xf32>
    %25 = arith.addf %19, %24 : vector<1x28xf32>
    %c2 = arith.constant 2 : index
    %26 = memref.load %arg1[%c2] : memref<3xf32, #tpu.memory_space<smem>>
    %c0_17 = arith.constant 0 : index
    %c2_18 = arith.constant 2 : index
    %c0_19 = arith.constant 0 : index
    %c0_20 = arith.constant 0 : index
    %27 = vector.load %arg0[%c0_17, %c2_18, %c0_19, %c0_20] : memref<1x3x28x28xf32, #tpu.memory_space<vmem>>, vector<1x1x1x28xf32>
    %28 = vector.shape_cast %27 : vector<1x1x1x28xf32> to vector<1x28xf32>
    %29 = vector.broadcast %26 : f32 to vector<1x28xf32>
    %30 = arith.mulf %29, %28 : vector<1x28xf32>
    %31 = arith.addf %25, %30 : vector<1x28xf32>
    %32 = vector.broadcast %31 : vector<1x28xf32> to vector<6x28xf32>
    %33 = arith.mulf %32, %7 : vector<6x28xf32>
    %cst_21 = arith.constant dense<0.000000e+00> : vector<6xf32>
    %34 = vector.multi_reduction <add>, %33, %cst_21 [1] : vector<6x28xf32> to vector<6xf32>
    %35 = vector.shape_cast %34 : vector<6xf32> to vector<6x1xf32>
    %36 = vector.shape_cast %35 : vector<6x1xf32> to vector<1x6x1xf32>
    %37 = vector.broadcast %8 : vector<8x1x1xf32> to vector<8x6x1xf32>
    %38 = vector.broadcast %36 : vector<1x6x1xf32> to vector<8x6x1xf32>
    %39 = arith.mulf %37, %38 : vector<8x6x1xf32>
    %40 = vector.broadcast %11 : vector<8x1x1xf32> to vector<8x6x1xf32>
    %41 = arith.addf %39, %40 : vector<8x6x1xf32>
    %cst_22 = arith.constant 0.000000e+00 : f32
    %42 = vector.broadcast %cst_22 : f32 to vector<8x6x1xf32>
    %43 = arith.maximumf %41, %42 : vector<8x6x1xf32>
    %c0_23 = arith.constant 0 : index
    %c0_24 = arith.constant 0 : index
    %c0_25 = arith.constant 0 : index
    %c0_26 = arith.constant 0 : index
    %44 = vector.load %arg5[%c0_23, %c0_24, %c0_25, %c0_26] : memref<1x8x6x6xf32, #tpu.memory_space<vmem>>, vector<1x8x6x1xf32>
    %45 = vector.shape_cast %44 : vector<1x8x6x1xf32> to vector<8x6x1xf32>
    %46 = vector.shape_cast %43 : vector<8x6x1xf32> to vector<1x8x6x1xf32>
    tpu.vector_store %arg5[%c0_23, %c0_24, %c0_25, %c0_26], %46 {strides = array<i32>} : memref<1x8x6x6xf32, #tpu.memory_space<vmem>>, vector<1x8x6x1xf32>,
    %c0_27 = arith.constant 0 : index
    %47 = memref.load %arg1[%c0_27] : memref<3xf32, #tpu.memory_space<smem>>
    %c0_28 = arith.constant 0 : index
    %c0_29 = arith.constant 0 : index
    %c5 = arith.constant 5 : index
    %c0_30 = arith.constant 0 : index
    %48 = vector.load %arg0[%c0_28, %c0_29, %c5, %c0_30] : memref<1x3x28x28xf32, #tpu.memory_space<vmem>>, vector<1x1x1x28xf32>
    %49 = vector.shape_cast %48 : vector<1x1x1x28xf32> to vector<1x28xf32>
    %50 = vector.broadcast %47 : f32 to vector<1x28xf32>
    %51 = arith.mulf %50, %49 : vector<1x28xf32>
    %52 = vector.broadcast %12 : f32 to vector<1x28xf32>
    %53 = arith.addf %52, %51 : vector<1x28xf32>
    %c1_31 = arith.constant 1 : index
    %54 = memref.load %arg1[%c1_31] : memref<3xf32, #tpu.memory_space<smem>>
    %c0_32 = arith.constant 0 : index
    %c1_33 = arith.constant 1 : index
    %c5_34 = arith.constant 5 : index
    %c0_35 = arith.constant 0 : index
    %55 = vector.load %arg0[%c0_32, %c1_33, %c5_34, %c0_35] : memref<1x3x28x28xf32, #tpu.memory_space<vmem>>, vector<1x1x1x28xf32>
    %56 = vector.shape_cast %55 : vector<1x1x1x28xf32> to vector<1x28xf32>
    %57 = vector.broadcast %54 : f32 to vector<1x28xf32>
    %58 = arith.mulf %57, %56 : vector<1x28xf32>
    %59 = arith.addf %53, %58 : vector<1x28xf32>
    %c2_36 = arith.constant 2 : index
    %60 = memref.load %arg1[%c2_36] : memref<3xf32, #tpu.memory_space<smem>>
    %c0_37 = arith.constant 0 : index
    %c2_38 = arith.constant 2 : index
    %c5_39 = arith.constant 5 : index
    %c0_40 = arith.constant 0 : index
    %61 = vector.load %arg0[%c0_37, %c2_38, %c5_39, %c0_40] : memref<1x3x28x28xf32, #tpu.memory_space<vmem>>, vector<1x1x1x28xf32>
    %62 = vector.shape_cast %61 : vector<1x1x1x28xf32> to vector<1x28xf32>
    %63 = vector.broadcast %60 : f32 to vector<1x28xf32>
    %64 = arith.mulf %63, %62 : vector<1x28xf32>
    %65 = arith.addf %59, %64 : vector<1x28xf32>
    %66 = vector.broadcast %65 : vector<1x28xf32> to vector<6x28xf32>
    %67 = arith.mulf %66, %7 : vector<6x28xf32>
    %cst_41 = arith.constant dense<0.000000e+00> : vector<6xf32>
    %68 = vector.multi_reduction <add>, %67, %cst_41 [1] : vector<6x28xf32> to vector<6xf32>
    %69 = vector.shape_cast %68 : vector<6xf32> to vector<6x1xf32>
    %70 = vector.shape_cast %69 : vector<6x1xf32> to vector<1x6x1xf32>
    %71 = vector.broadcast %8 : vector<8x1x1xf32> to vector<8x6x1xf32>
    %72 = vector.broadcast %70 : vector<1x6x1xf32> to vector<8x6x1xf32>
    %73 = arith.mulf %71, %72 : vector<8x6x1xf32>
    %74 = vector.broadcast %11 : vector<8x1x1xf32> to vector<8x6x1xf32>
    %75 = arith.addf %73, %74 : vector<8x6x1xf32>
    %cst_42 = arith.constant 0.000000e+00 : f32
    %76 = vector.broadcast %cst_42 : f32 to vector<8x6x1xf32>
    %77 = arith.maximumf %75, %76 : vector<8x6x1xf32>
    %c0_43 = arith.constant 0 : index
    %c0_44 = arith.constant 0 : index
    %c0_45 = arith.constant 0 : index
    %c1_46 = arith.constant 1 : index
    %78 = vector.load %arg5[%c0_43, %c0_44, %c0_45, %c1_46] : memref<1x8x6x6xf32, #tpu.memory_space<vmem>>, vector<1x8x6x1xf32>
    %79 = vector.shape_cast %78 : vector<1x8x6x1xf32> to vector<8x6x1xf32>
    %80 = vector.shape_cast %77 : vector<8x6x1xf32> to vector<1x8x6x1xf32>
    tpu.vector_store %arg5[%c0_43, %c0_44, %c0_45, %c1_46], %80 {strides = array<i32>} : memref<1x8x6x6xf32, #tpu.memory_space<vmem>>, vector<1x8x6x1xf32>,
    %c0_47 = arith.constant 0 : index
    %81 = memref.load %arg1[%c0_47] : memref<3xf32, #tpu.memory_space<smem>>
    %c0_48 = arith.constant 0 : index
    %c0_49 = arith.constant 0 : index
    %c10 = arith.constant 10 : index
    %c0_50 = arith.constant 0 : index
    %82 = vector.load %arg0[%c0_48, %c0_49, %c10, %c0_50] : memref<1x3x28x28xf32, #tpu.memory_space<vmem>>, vector<1x1x1x28xf32>
    %83 = vector.shape_cast %82 : vector<1x1x1x28xf32> to vector<1x28xf32>
    %84 = vector.broadcast %81 : f32 to vector<1x28xf32>
    %85 = arith.mulf %84, %83 : vector<1x28xf32>
    %86 = vector.broadcast %12 : f32 to vector<1x28xf32>
    %87 = arith.addf %86, %85 : vector<1x28xf32>
    %c1_51 = arith.constant 1 : index
    %88 = memref.load %arg1[%c1_51] : memref<3xf32, #tpu.memory_space<smem>>
    %c0_52 = arith.constant 0 : index
    %c1_53 = arith.constant 1 : index
    %c10_54 = arith.constant 10 : index
    %c0_55 = arith.constant 0 : index
    %89 = vector.load %arg0[%c0_52, %c1_53, %c10_54, %c0_55] : memref<1x3x28x28xf32, #tpu.memory_space<vmem>>, vector<1x1x1x28xf32>
    %90 = vector.shape_cast %89 : vector<1x1x1x28xf32> to vector<1x28xf32>
    %91 = vector.broadcast %88 : f32 to vector<1x28xf32>
    %92 = arith.mulf %91, %90 : vector<1x28xf32>
    %93 = arith.addf %87, %92 : vector<1x28xf32>
    %c2_56 = arith.constant 2 : index
    %94 = memref.load %arg1[%c2_56] : memref<3xf32, #tpu.memory_space<smem>>
    %c0_57 = arith.constant 0 : index
    %c2_58 = arith.constant 2 : index
    %c10_59 = arith.constant 10 : index
    %c0_60 = arith.constant 0 : index
    %95 = vector.load %arg0[%c0_57, %c2_58, %c10_59, %c0_60] : memref<1x3x28x28xf32, #tpu.memory_space<vmem>>, vector<1x1x1x28xf32>
    %96 = vector.shape_cast %95 : vector<1x1x1x28xf32> to vector<1x28xf32>
    %97 = vector.broadcast %94 : f32 to vector<1x28xf32>
    %98 = arith.mulf %97, %96 : vector<1x28xf32>
    %99 = arith.addf %93, %98 : vector<1x28xf32>
    %100 = vector.broadcast %99 : vector<1x28xf32> to vector<6x28xf32>
    %101 = arith.mulf %100, %7 : vector<6x28xf32>
    %cst_61 = arith.constant dense<0.000000e+00> : vector<6xf32>
    %102 = vector.multi_reduction <add>, %101, %cst_61 [1] : vector<6x28xf32> to vector<6xf32>
    %103 = vector.shape_cast %102 : vector<6xf32> to vector<6x1xf32>
    %104 = vector.shape_cast %103 : vector<6x1xf32> to vector<1x6x1xf32>
    %105 = vector.broadcast %8 : vector<8x1x1xf32> to vector<8x6x1xf32>
    %106 = vector.broadcast %104 : vector<1x6x1xf32> to vector<8x6x1xf32>
    %107 = arith.mulf %105, %106 : vector<8x6x1xf32>
    %108 = vector.broadcast %11 : vector<8x1x1xf32> to vector<8x6x1xf32>
    %109 = arith.addf %107, %108 : vector<8x6x1xf32>
    %cst_62 = arith.constant 0.000000e+00 : f32
    %110 = vector.broadcast %cst_62 : f32 to vector<8x6x1xf32>
    %111 = arith.maximumf %109, %110 : vector<8x6x1xf32>
    %c0_63 = arith.constant 0 : index
    %c0_64 = arith.constant 0 : index
    %c0_65 = arith.constant 0 : index
    %c2_66 = arith.constant 2 : index
    %112 = vector.load %arg5[%c0_63, %c0_64, %c0_65, %c2_66] : memref<1x8x6x6xf32, #tpu.memory_space<vmem>>, vector<1x8x6x1xf32>
    %113 = vector.shape_cast %112 : vector<1x8x6x1xf32> to vector<8x6x1xf32>
    %114 = vector.shape_cast %111 : vector<8x6x1xf32> to vector<1x8x6x1xf32>
    tpu.vector_store %arg5[%c0_63, %c0_64, %c0_65, %c2_66], %114 {strides = array<i32>} : memref<1x8x6x6xf32, #tpu.memory_space<vmem>>, vector<1x8x6x1xf32>,
    %c0_67 = arith.constant 0 : index
    %115 = memref.load %arg1[%c0_67] : memref<3xf32, #tpu.memory_space<smem>>
    %c0_68 = arith.constant 0 : index
    %c0_69 = arith.constant 0 : index
    %c15 = arith.constant 15 : index
    %c0_70 = arith.constant 0 : index
    %116 = vector.load %arg0[%c0_68, %c0_69, %c15, %c0_70] : memref<1x3x28x28xf32, #tpu.memory_space<vmem>>, vector<1x1x1x28xf32>
    %117 = vector.shape_cast %116 : vector<1x1x1x28xf32> to vector<1x28xf32>
    %118 = vector.broadcast %115 : f32 to vector<1x28xf32>
    %119 = arith.mulf %118, %117 : vector<1x28xf32>
    %120 = vector.broadcast %12 : f32 to vector<1x28xf32>
    %121 = arith.addf %120, %119 : vector<1x28xf32>
    %c1_71 = arith.constant 1 : index
    %122 = memref.load %arg1[%c1_71] : memref<3xf32, #tpu.memory_space<smem>>
    %c0_72 = arith.constant 0 : index
    %c1_73 = arith.constant 1 : index
    %c15_74 = arith.constant 15 : index
    %c0_75 = arith.constant 0 : index
    %123 = vector.load %arg0[%c0_72, %c1_73, %c15_74, %c0_75] : memref<1x3x28x28xf32, #tpu.memory_space<vmem>>, vector<1x1x1x28xf32>
    %124 = vector.shape_cast %123 : vector<1x1x1x28xf32> to vector<1x28xf32>
    %125 = vector.broadcast %122 : f32 to vector<1x28xf32>
    %126 = arith.mulf %125, %124 : vector<1x28xf32>
    %127 = arith.addf %121, %126 : vector<1x28xf32>
    %c2_76 = arith.constant 2 : index
    %128 = memref.load %arg1[%c2_76] : memref<3xf32, #tpu.memory_space<smem>>
    %c0_77 = arith.constant 0 : index
    %c2_78 = arith.constant 2 : index
    %c15_79 = arith.constant 15 : index
    %c0_80 = arith.constant 0 : index
    %129 = vector.load %arg0[%c0_77, %c2_78, %c15_79, %c0_80] : memref<1x3x28x28xf32, #tpu.memory_space<vmem>>, vector<1x1x1x28xf32>
    %130 = vector.shape_cast %129 : vector<1x1x1x28xf32> to vector<1x28xf32>
    %131 = vector.broadcast %128 : f32 to vector<1x28xf32>
    %132 = arith.mulf %131, %130 : vector<1x28xf32>
    %133 = arith.addf %127, %132 : vector<1x28xf32>
    %134 = vector.broadcast %133 : vector<1x28xf32> to vector<6x28xf32>
    %135 = arith.mulf %134, %7 : vector<6x28xf32>
    %cst_81 = arith.constant dense<0.000000e+00> : vector<6xf32>
    %136 = vector.multi_reduction <add>, %135, %cst_81 [1] : vector<6x28xf32> to vector<6xf32>
    %137 = vector.shape_cast %136 : vector<6xf32> to vector<6x1xf32>
    %138 = vector.shape_cast %137 : vector<6x1xf32> to vector<1x6x1xf32>
    %139 = vector.broadcast %8 : vector<8x1x1xf32> to vector<8x6x1xf32>
    %140 = vector.broadcast %138 : vector<1x6x1xf32> to vector<8x6x1xf32>
    %141 = arith.mulf %139, %140 : vector<8x6x1xf32>
    %142 = vector.broadcast %11 : vector<8x1x1xf32> to vector<8x6x1xf32>
    %143 = arith.addf %141, %142 : vector<8x6x1xf32>
    %cst_82 = arith.constant 0.000000e+00 : f32
    %144 = vector.broadcast %cst_82 : f32 to vector<8x6x1xf32>
    %145 = arith.maximumf %143, %144 : vector<8x6x1xf32>
    %c0_83 = arith.constant 0 : index
    %c0_84 = arith.constant 0 : index
    %c0_85 = arith.constant 0 : index
    %c3 = arith.constant 3 : index
    %146 = vector.load %arg5[%c0_83, %c0_84, %c0_85, %c3] : memref<1x8x6x6xf32, #tpu.memory_space<vmem>>, vector<1x8x6x1xf32>
    %147 = vector.shape_cast %146 : vector<1x8x6x1xf32> to vector<8x6x1xf32>
    %148 = vector.shape_cast %145 : vector<8x6x1xf32> to vector<1x8x6x1xf32>
    tpu.vector_store %arg5[%c0_83, %c0_84, %c0_85, %c3], %148 {strides = array<i32>} : memref<1x8x6x6xf32, #tpu.memory_space<vmem>>, vector<1x8x6x1xf32>,
    %c0_86 = arith.constant 0 : index
    %149 = memref.load %arg1[%c0_86] : memref<3xf32, #tpu.memory_space<smem>>
    %c0_87 = arith.constant 0 : index
    %c0_88 = arith.constant 0 : index
    %c20 = arith.constant 20 : index
    %c0_89 = arith.constant 0 : index
    %150 = vector.load %arg0[%c0_87, %c0_88, %c20, %c0_89] : memref<1x3x28x28xf32, #tpu.memory_space<vmem>>, vector<1x1x1x28xf32>
    %151 = vector.shape_cast %150 : vector<1x1x1x28xf32> to vector<1x28xf32>
    %152 = vector.broadcast %149 : f32 to vector<1x28xf32>
    %153 = arith.mulf %152, %151 : vector<1x28xf32>
    %154 = vector.broadcast %12 : f32 to vector<1x28xf32>
    %155 = arith.addf %154, %153 : vector<1x28xf32>
    %c1_90 = arith.constant 1 : index
    %156 = memref.load %arg1[%c1_90] : memref<3xf32, #tpu.memory_space<smem>>
    %c0_91 = arith.constant 0 : index
    %c1_92 = arith.constant 1 : index
    %c20_93 = arith.constant 20 : index
    %c0_94 = arith.constant 0 : index
    %157 = vector.load %arg0[%c0_91, %c1_92, %c20_93, %c0_94] : memref<1x3x28x28xf32, #tpu.memory_space<vmem>>, vector<1x1x1x28xf32>
    %158 = vector.shape_cast %157 : vector<1x1x1x28xf32> to vector<1x28xf32>
    %159 = vector.broadcast %156 : f32 to vector<1x28xf32>
    %160 = arith.mulf %159, %158 : vector<1x28xf32>
    %161 = arith.addf %155, %160 : vector<1x28xf32>
    %c2_95 = arith.constant 2 : index
    %162 = memref.load %arg1[%c2_95] : memref<3xf32, #tpu.memory_space<smem>>
    %c0_96 = arith.constant 0 : index
    %c2_97 = arith.constant 2 : index
    %c20_98 = arith.constant 20 : index
    %c0_99 = arith.constant 0 : index
    %163 = vector.load %arg0[%c0_96, %c2_97, %c20_98, %c0_99] : memref<1x3x28x28xf32, #tpu.memory_space<vmem>>, vector<1x1x1x28xf32>
    %164 = vector.shape_cast %163 : vector<1x1x1x28xf32> to vector<1x28xf32>
    %165 = vector.broadcast %162 : f32 to vector<1x28xf32>
    %166 = arith.mulf %165, %164 : vector<1x28xf32>
    %167 = arith.addf %161, %166 : vector<1x28xf32>
    %168 = vector.broadcast %167 : vector<1x28xf32> to vector<6x28xf32>
    %169 = arith.mulf %168, %7 : vector<6x28xf32>
    %cst_100 = arith.constant dense<0.000000e+00> : vector<6xf32>
    %170 = vector.multi_reduction <add>, %169, %cst_100 [1] : vector<6x28xf32> to vector<6xf32>
    %171 = vector.shape_cast %170 : vector<6xf32> to vector<6x1xf32>
    %172 = vector.shape_cast %171 : vector<6x1xf32> to vector<1x6x1xf32>
    %173 = vector.broadcast %8 : vector<8x1x1xf32> to vector<8x6x1xf32>
    %174 = vector.broadcast %172 : vector<1x6x1xf32> to vector<8x6x1xf32>
    %175 = arith.mulf %173, %174 : vector<8x6x1xf32>
    %176 = vector.broadcast %11 : vector<8x1x1xf32> to vector<8x6x1xf32>
    %177 = arith.addf %175, %176 : vector<8x6x1xf32>
    %cst_101 = arith.constant 0.000000e+00 : f32
    %178 = vector.broadcast %cst_101 : f32 to vector<8x6x1xf32>
    %179 = arith.maximumf %177, %178 : vector<8x6x1xf32>
    %c0_102 = arith.constant 0 : index
    %c0_103 = arith.constant 0 : index
    %c0_104 = arith.constant 0 : index
    %c4 = arith.constant 4 : index
    %180 = vector.load %arg5[%c0_102, %c0_103, %c0_104, %c4] : memref<1x8x6x6xf32, #tpu.memory_space<vmem>>, vector<1x8x6x1xf32>
    %181 = vector.shape_cast %180 : vector<1x8x6x1xf32> to vector<8x6x1xf32>
    %182 = vector.shape_cast %179 : vector<8x6x1xf32> to vector<1x8x6x1xf32>
    tpu.vector_store %arg5[%c0_102, %c0_103, %c0_104, %c4], %182 {strides = array<i32>} : memref<1x8x6x6xf32, #tpu.memory_space<vmem>>, vector<1x8x6x1xf32>,
    %c0_105 = arith.constant 0 : index
    %183 = memref.load %arg1[%c0_105] : memref<3xf32, #tpu.memory_space<smem>>
    %c0_106 = arith.constant 0 : index
    %c0_107 = arith.constant 0 : index
    %c25 = arith.constant 25 : index
    %c0_108 = arith.constant 0 : index
    %184 = vector.load %arg0[%c0_106, %c0_107, %c25, %c0_108] : memref<1x3x28x28xf32, #tpu.memory_space<vmem>>, vector<1x1x1x28xf32>
    %185 = vector.shape_cast %184 : vector<1x1x1x28xf32> to vector<1x28xf32>
    %186 = vector.broadcast %183 : f32 to vector<1x28xf32>
    %187 = arith.mulf %186, %185 : vector<1x28xf32>
    %188 = vector.broadcast %12 : f32 to vector<1x28xf32>
    %189 = arith.addf %188, %187 : vector<1x28xf32>
    %c1_109 = arith.constant 1 : index
    %190 = memref.load %arg1[%c1_109] : memref<3xf32, #tpu.memory_space<smem>>
    %c0_110 = arith.constant 0 : index
    %c1_111 = arith.constant 1 : index
    %c25_112 = arith.constant 25 : index
    %c0_113 = arith.constant 0 : index
    %191 = vector.load %arg0[%c0_110, %c1_111, %c25_112, %c0_113] : memref<1x3x28x28xf32, #tpu.memory_space<vmem>>, vector<1x1x1x28xf32>
    %192 = vector.shape_cast %191 : vector<1x1x1x28xf32> to vector<1x28xf32>
    %193 = vector.broadcast %190 : f32 to vector<1x28xf32>
    %194 = arith.mulf %193, %192 : vector<1x28xf32>
    %195 = arith.addf %189, %194 : vector<1x28xf32>
    %c2_114 = arith.constant 2 : index
    %196 = memref.load %arg1[%c2_114] : memref<3xf32, #tpu.memory_space<smem>>
    %c0_115 = arith.constant 0 : index
    %c2_116 = arith.constant 2 : index
    %c25_117 = arith.constant 25 : index
    %c0_118 = arith.constant 0 : index
    %197 = vector.load %arg0[%c0_115, %c2_116, %c25_117, %c0_118] : memref<1x3x28x28xf32, #tpu.memory_space<vmem>>, vector<1x1x1x28xf32>
    %198 = vector.shape_cast %197 : vector<1x1x1x28xf32> to vector<1x28xf32>
    %199 = vector.broadcast %196 : f32 to vector<1x28xf32>
    %200 = arith.mulf %199, %198 : vector<1x28xf32>
    %201 = arith.addf %195, %200 : vector<1x28xf32>
    %202 = vector.broadcast %201 : vector<1x28xf32> to vector<6x28xf32>
    %203 = arith.mulf %202, %7 : vector<6x28xf32>
    %cst_119 = arith.constant dense<0.000000e+00> : vector<6xf32>
    %204 = vector.multi_reduction <add>, %203, %cst_119 [1] : vector<6x28xf32> to vector<6xf32>
    %205 = vector.shape_cast %204 : vector<6xf32> to vector<6x1xf32>
    %206 = vector.shape_cast %205 : vector<6x1xf32> to vector<1x6x1xf32>
    %207 = vector.broadcast %8 : vector<8x1x1xf32> to vector<8x6x1xf32>
    %208 = vector.broadcast %206 : vector<1x6x1xf32> to vector<8x6x1xf32>
    %209 = arith.mulf %207, %208 : vector<8x6x1xf32>
    %210 = vector.broadcast %11 : vector<8x1x1xf32> to vector<8x6x1xf32>
    %211 = arith.addf %209, %210 : vector<8x6x1xf32>
    %cst_120 = arith.constant 0.000000e+00 : f32
    %212 = vector.broadcast %cst_120 : f32 to vector<8x6x1xf32>
    %213 = arith.maximumf %211, %212 : vector<8x6x1xf32>
    %c0_121 = arith.constant 0 : index
    %c0_122 = arith.constant 0 : index
    %c0_123 = arith.constant 0 : index
    %c5_124 = arith.constant 5 : index
    %214 = vector.load %arg5[%c0_121, %c0_122, %c0_123, %c5_124] : memref<1x8x6x6xf32, #tpu.memory_space<vmem>>, vector<1x8x6x1xf32>
    %215 = vector.shape_cast %214 : vector<1x8x6x1xf32> to vector<8x6x1xf32>
    %216 = vector.shape_cast %213 : vector<8x6x1xf32> to vector<1x8x6x1xf32>
    tpu.vector_store %arg5[%c0_121, %c0_122, %c0_123, %c5_124], %216 {strides = array<i32>} : memref<1x8x6x6xf32, #tpu.memory_space<vmem>>, vector<1x8x6x1xf32>,
    return
  }
}

</mosaic_0001>

<llo_original>
// kernel: model_forward.1
$region0: #{model_forward.1}
  #allocation0 [shape = 'u32[]', space=smem, size = 0x4, offset = 0x4, fixed_abs, tag = 'smem constant byte address 0x4 - core index']
  #allocation1 [shape = 'u32[144,128]{1,0:T(1,128)}', space=vmem, size = 0x12000, scoped, tag = 'internal scratch']
  #allocation2 [shape = 'f32[1]{0:T(128)S(6)}', space=smem, size = 0x200, scoped, tag = 'scoped memory for model_forward.1']
  %s0 = inlined_call_operand.vmem [shape: f32[1,3,28,28], index: 0, kind: input, shape index: {}]
  %s1 = inlined_call_operand.vmem [shape: f32[3], index: 1, kind: input, shape index: {}]
  %s2 = inlined_call_operand.<no memory space> [shape: f32[1], index: 2, kind: input, shape index: {}]
  %s3 = inlined_call_operand.vmem [shape: f32[8,1,1], index: 3, kind: input, shape index: {}]
  %s4 = inlined_call_operand.vmem [shape: f32[8,1,1], index: 4, kind: input, shape index: {}]
  %s5 = inlined_call_operand.vmem [shape: f32[1,8,6,6], index: 5, kind: output, shape index: {}]
  %s6 = sld [smem:[#allocation0]]
  $region34: #{model_forward.1} parent=0
    _
  %s8 = ssub.s32 1, %s6
  %s9 = scalar_select 0, %s8, %s6
  %10 = sst [smem:[#allocation2]] %s2
  $region1: #{model_forward.1} parent=0
    #allocation3 [shape = 'u8[512]{0}', space=smem, size = 0x200, scoped, tag = 'input window, operand 1, single buffered']
    #allocation4 [shape = 's32[1]{0}', space=sflag, size = 0x4, scoped, tag = 'scoped memory for model_forward.1']
    %11 = vsyncpa [#allocation4], 0
    // Predicated region
    $region2: #{model_forward.1} parent=1 // pred_check
      _
    $region3: #{model_forward.1} parent=1 // pred_check_branch
      %13 = sbr.rel (0) target = $region5
    $region4: #{model_forward.1} parent=1 // pred_region
      _
    $region5: #{model_forward.1} parent=1 // pred_fallthru
      _
    // Predicated region
    $region6: #{model_forward.1} parent=1 // pred_check
      _
    $region7: #{model_forward.1} parent=1 // pred_check_branch
      %15 = sbr.rel (0) target = $region9
    $region8: #{model_forward.1} parent=1 // pred_region
      %s17 = ssub.s32 16, 16
      %18 = vsyncadd [#allocation4], %s17
      %s20 = sshll.u32 %s1, 4
      %s21 = int_to_ptr.vmem [resolvable:$true] %s20
      %23 = dma.vmem_to_smem %s21, 16, [#allocation3], [#allocation4]
    $region9: #{model_forward.1} parent=1 // pred_fallthru
      _
    // Predicated region
    $region10: #{model_forward.1} parent=1 // pred_check
      _
    $region11: #{model_forward.1} parent=1 // pred_check_branch
      %25 = sbr.rel (0) target = $region13
    $region12: #{model_forward.1} parent=1 // pred_region
      _
    $region13: #{model_forward.1} parent=1 // pred_fallthru
      _
    // Predicated region
    $region14: #{model_forward.1} parent=1 // pred_check
      _
    $region15: #{model_forward.1} parent=1 // pred_check_branch
      %27 = sbr.rel (0) target = $region17
    $region16: #{model_forward.1} parent=1 // pred_region
      _
    $region17: #{model_forward.1} parent=1 // pred_fallthru
      _
    // Predicated region
    $region18: #{model_forward.1} parent=1 // pred_check
      _
    $region19: #{model_forward.1} parent=1 // pred_check_branch
      %29 = sbr.rel (0) target = $region21
    $region20: #{model_forward.1} parent=1 // pred_region
      _
    $region21: #{model_forward.1} parent=1 // pred_fallthru
      _
    // Predicated region
    $region22: #{model_forward.1} parent=1 // pred_check
      _
    $region23: #{model_forward.1} parent=1 // pred_check_branch
      %31 = sbr.rel (0) target = $region25
    $region24: #{model_forward.1} parent=1 // pred_region
      %32 = dma.done [#allocation4], 16
    $region25: #{model_forward.1} parent=1 // pred_fallthru
      _
    %33 = sfence
    %v34 = vlaneseq
    %v35 = vand.u32 %v34, 127
    %v36 = vlaneseq
    %v37 = vshrl.u32 %v36, 7
    %v38 = vmul.u32 %v37, 5
    %vm39 = vcmp.eq.s32.totalorder %v35, %v38
    %v40 = vsel %vm39, 1.0, 0.0
    %v41 = vld [vmem:[%s3] sm:$0x1]
    %v42 = vld [vmem:[%s3 + $0x1] sm:$0x1]
    %v43 = vld [vmem:[%s3 + $0x2] sm:$0x1]
    %v44 = vld [vmem:[%s3 + $0x3] sm:$0x1]
    %v45 = vld [vmem:[%s3 + $0x4] sm:$0x1]
    %v46 = vld [vmem:[%s3 + $0x5] sm:$0x1]
    %v47 = vld [vmem:[%s3 + $0x6] sm:$0x1]
    %v48 = vld [vmem:[%s3 + $0x7] sm:$0x1]
    %v49 = vld [vmem:[%s4] sm:$0x1]
    %v50 = vld [vmem:[%s4 + $0x1] sm:$0x1]
    %v51 = vld [vmem:[%s4 + $0x2] sm:$0x1]
    %v52 = vld [vmem:[%s4 + $0x3] sm:$0x1]
    %v53 = vld [vmem:[%s4 + $0x4] sm:$0x1]
    %v54 = vld [vmem:[%s4 + $0x5] sm:$0x1]
    %v55 = vld [vmem:[%s4 + $0x6] sm:$0x1]
    %v56 = vld [vmem:[%s4 + $0x7] sm:$0x1]
    %v57 = vsub.f32 %v49, 0.000685
    %v58 = vsub.f32 %v50, 0.000685
    %v59 = vsub.f32 %v51, 0.000685
    %v60 = vsub.f32 %v52, 0.000685
    %v61 = vsub.f32 %v53, 0.000685
    %v62 = vsub.f32 %v54, 0.000685
    %v63 = vsub.f32 %v55, 0.000685
    %v64 = vsub.f32 %v56, 0.000685
    %s65 = sld [smem:[#allocation2]]
    %s66 = sld [smem:[#allocation3]]
    %v67 = vld [vmem:[%s0] sm:$0x1]
    %v68 = vstv %s66
    %v69 = vmul.f32 %v68, %v67
    %v70 = vstv %s65
    %v71 = vadd.f32 %v70, %v69
    %s72 = sld [smem:[#allocation3 + $0x1]]
    %s73 = scalar_lea.vmem %s0, 32
    %v74 = vld [vmem:[%s73] sm:$0x1]
    %v75 = vstv %s72
    %v76 = vmul.f32 %v75, %v74
    %v77 = vadd.f32 %v71, %v76
    %s78 = sld [smem:[#allocation3 + $0x2]]
    %s79 = scalar_lea.vmem %s0, 64
    %v80 = vld [vmem:[%s79] sm:$0x1]
    %v81 = vstv %s78
    %v82 = vmul.f32 %v81, %v80
    %v83 = vadd.f32 %v77, %v82
    %v84 = vlaneseq
    %v85 = vshrl.u32 %v84, 7
    %v86 = vsub.s32 0, %v85
    %v87 = vrot.slane %v83, %v86
    %v88 = vmul.f32 %v87, %v40
    %vm89 = vcmask 226304
    %v90 = vsel %vm89, %v88, 0.0
    %91 = vadd.xlane.f32.xlu0 %v90
    %v92 = vpop.xlane.xlu0 %91
    %v101 = vlaneseq
    %v102 = vshrl.u32 %v101, 7
    %v103 = vsub.s32 0, %v102
    %v104 = vrot.slane %v41, %v103
    %v105 = vlaneseq
    %v106 = vshrl.u32 %v105, 7
    %v107 = vsub.s32 0, %v106
    %v108 = vrot.slane %v42, %v107
    %v109 = vlaneseq
    %v110 = vshrl.u32 %v109, 7
    %v111 = vsub.s32 0, %v110
    %v112 = vrot.slane %v43, %v111
    %v113 = vlaneseq
    %v114 = vshrl.u32 %v113, 7
    %v115 = vsub.s32 0, %v114
    %v116 = vrot.slane %v44, %v115
    %v117 = vlaneseq
    %v118 = vshrl.u32 %v117, 7
    %v119 = vsub.s32 0, %v118
    %v120 = vrot.slane %v45, %v119
    %v121 = vlaneseq
    %v122 = vshrl.u32 %v121, 7
    %v123 = vsub.s32 0, %v122
    %v124 = vrot.slane %v46, %v123
    %v125 = vlaneseq
    %v126 = vshrl.u32 %v125, 7
    %v127 = vsub.s32 0, %v126
    %v128 = vrot.slane %v47, %v127
    %v129 = vlaneseq
    %v130 = vshrl.u32 %v129, 7
    %v131 = vsub.s32 0, %v130
    %v132 = vrot.slane %v48, %v131
    %v141 = vmul.f32 %v104, %v92
    %v142 = vmul.f32 %v108, %v92
    %v143 = vmul.f32 %v112, %v92
    %v144 = vmul.f32 %v116, %v92
    %v145 = vmul.f32 %v120, %v92
    %v146 = vmul.f32 %v124, %v92
    %v147 = vmul.f32 %v128, %v92
    %v148 = vmul.f32 %v132, %v92
    %v157 = vlaneseq
    %v158 = vshrl.u32 %v157, 7
    %v159 = vsub.s32 0, %v158
    %v160 = vrot.slane %v57, %v159
    %v161 = vlaneseq
    %v162 = vshrl.u32 %v161, 7
    %v163 = vsub.s32 0, %v162
    %v164 = vrot.slane %v58, %v163
    %v165 = vlaneseq
    %v166 = vshrl.u32 %v165, 7
    %v167 = vsub.s32 0, %v166
    %v168 = vrot.slane %v59, %v167
    %v169 = vlaneseq
    %v170 = vshrl.u32 %v169, 7
    %v171 = vsub.s32 0, %v170
    %v172 = vrot.slane %v60, %v171
    %v173 = vlaneseq
    %v174 = vshrl.u32 %v173, 7
    %v175 = vsub.s32 0, %v174
    %v176 = vrot.slane %v61, %v175
    %v177 = vlaneseq
    %v178 = vshrl.u32 %v177, 7
    %v179 = vsub.s32 0, %v178
    %v180 = vrot.slane %v62, %v179
    %v181 = vlaneseq
    %v182 = vshrl.u32 %v181, 7
    %v183 = vsub.s32 0, %v182
    %v184 = vrot.slane %v63, %v183
    %v185 = vlaneseq
    %v186 = vshrl.u32 %v185, 7
    %v187 = vsub.s32 0, %v186
    %v188 = vrot.slane %v64, %v187
    %v197 = vadd.f32 %v141, %v160
    %v198 = vadd.f32 %v142, %v164
    %v199 = vadd.f32 %v143, %v168
    %v200 = vadd.f32 %v144, %v172
    %v201 = vadd.f32 %v145, %v176
    %v202 = vadd.f32 %v146, %v180
    %v203 = vadd.f32 %v147, %v184
    %v204 = vadd.f32 %v148, %v188
    %v205 = vmax.f32 %v197, 0.0
    %v206 = vmax.f32 %v198, 0.0
    %v207 = vmax.f32 %v199, 0.0
    %v208 = vmax.f32 %v200, 0.0
    %v209 = vmax.f32 %v201, 0.0
    %v210 = vmax.f32 %v202, 0.0
    %v211 = vmax.f32 %v203, 0.0
    %v212 = vmax.f32 %v204, 0.0
    %vm213 = vcmask 5120
    %214 = vst.msk [vmem:[%s5] sm:$0x3f] %vm213, %v205
    %215 = vst.msk [vmem:[%s5 + $0x8] sm:$0x3f] %vm213, %v206
    %216 = vst.msk [vmem:[%s5 + $0x10] sm:$0x3f] %vm213, %v207
    %217 = vst.msk [vmem:[%s5 + $0x18] sm:$0x3f] %vm213, %v208
    %218 = vst.msk [vmem:[%s5 + $0x20] sm:$0x3f] %vm213, %v209
    %219 = vst.msk [vmem:[%s5 + $0x28] sm:$0x3f] %vm213, %v210
    %220 = vst.msk [vmem:[%s5 + $0x30] sm:$0x3f] %vm213, %v211
    %221 = vst.msk [vmem:[%s5 + $0x38] sm:$0x3f] %vm213, %v212
    %s222 = sld [smem:[#allocation3]]
    %v223 = vld [vmem:[%s0 + $0x5] sm:$0x1]
    %v224 = vstv %s222
    %v225 = vmul.f32 %v224, %v223
    %v226 = vadd.f32 %v70, %v225
    %s227 = sld [smem:[#allocation3 + $0x1]]
    %v228 = vld [vmem:[%s73 + $0x5] sm:$0x1]
    %v229 = vstv %s227
    %v230 = vmul.f32 %v229, %v228
    %v231 = vadd.f32 %v226, %v230
    %s232 = sld [smem:[#allocation3 + $0x2]]
    %v233 = vld [vmem:[%s79 + $0x5] sm:$0x1]
    %v234 = vstv %s232
    %v235 = vmul.f32 %v234, %v233
    %v236 = vadd.f32 %v231, %v235
    %v237 = vlaneseq
    %v238 = vshrl.u32 %v237, 7
    %v239 = vsub.s32 0, %v238
    %v240 = vrot.slane %v236, %v239
    %v241 = vmul.f32 %v240, %v40
    %v242 = vsel %vm89, %v241, 0.0
    %243 = vadd.xlane.f32.xlu0 %v242
    %v244 = vpop.xlane.xlu0 %243
    %v245 = vmul.f32 %v104, %v244
    %v246 = vmul.f32 %v108, %v244
    %v247 = vmul.f32 %v112, %v244
    %v248 = vmul.f32 %v116, %v244
    %v249 = vmul.f32 %v120, %v244
    %v250 = vmul.f32 %v124, %v244
    %v251 = vmul.f32 %v128, %v244
    %v252 = vmul.f32 %v132, %v244
    %v253 = vadd.f32 %v245, %v160
    %v254 = vadd.f32 %v246, %v164
    %v255 = vadd.f32 %v247, %v168
    %v256 = vadd.f32 %v248, %v172
    %v257 = vadd.f32 %v249, %v176
    %v258 = vadd.f32 %v250, %v180
    %v259 = vadd.f32 %v251, %v184
    %v260 = vadd.f32 %v252, %v188
    %v261 = vmax.f32 %v253, 0.0
    %v262 = vmax.f32 %v254, 0.0
    %v263 = vmax.f32 %v255, 0.0
    %v264 = vmax.f32 %v256, 0.0
    %v265 = vmax.f32 %v257, 0.0
    %v266 = vmax.f32 %v258, 0.0
    %v267 = vmax.f32 %v259, 0.0
    %v268 = vmax.f32 %v260, 0.0
    %277 = vrot.lane.b32.xlu0 %v261, 1
    %v278 = vpop.permute.xlu0 %277
    %279 = vrot.lane.b32.xlu0 %v262, 1
    %v280 = vpop.permute.xlu0 %279
    %281 = vrot.lane.b32.xlu0 %v263, 1
    %v282 = vpop.permute.xlu0 %281
    %283 = vrot.lane.b32.xlu0 %v264, 1
    %v284 = vpop.permute.xlu0 %283
    %285 = vrot.lane.b32.xlu0 %v265, 1
    %v286 = vpop.permute.xlu0 %285
    %287 = vrot.lane.b32.xlu0 %v266, 1
    %v288 = vpop.permute.xlu0 %287
    %289 = vrot.lane.b32.xlu0 %v267, 1
    %v290 = vpop.permute.xlu0 %289
    %291 = vrot.lane.b32.xlu0 %v268, 1
    %v292 = vpop.permute.xlu0 %291
    %vm301 = vcmask 13320
    %302 = vst.msk [vmem:[%s5] sm:$0x3f] %vm301, %v278
    %303 = vst.msk [vmem:[%s5 + $0x8] sm:$0x3f] %vm301, %v280
    %304 = vst.msk [vmem:[%s5 + $0x10] sm:$0x3f] %vm301, %v282
    %305 = vst.msk [vmem:[%s5 + $0x18] sm:$0x3f] %vm301, %v284
    %306 = vst.msk [vmem:[%s5 + $0x20] sm:$0x3f] %vm301, %v286
    %307 = vst.msk [vmem:[%s5 + $0x28] sm:$0x3f] %vm301, %v288
    %308 = vst.msk [vmem:[%s5 + $0x30] sm:$0x3f] %vm301, %v290
    %309 = vst.msk [vmem:[%s5 + $0x38] sm:$0x3f] %vm301, %v292
    %s310 = sld [smem:[#allocation3]]
    %v311 = vld [vmem:[%s0 + $0xa] sm:$0x1]
    %v312 = vstv %s310
    %v313 = vmul.f32 %v312, %v311
    %v314 = vadd.f32 %v70, %v313
    %s315 = sld [smem:[#allocation3 + $0x1]]
    %v316 = vld [vmem:[%s73 + $0xa] sm:$0x1]
    %v317 = vstv %s315
    %v318 = vmul.f32 %v317, %v316
    %v319 = vadd.f32 %v314, %v318
    %s320 = sld [smem:[#allocation3 + $0x2]]
    %v321 = vld [vmem:[%s79 + $0xa] sm:$0x1]
    %v322 = vstv %s320
    %v323 = vmul.f32 %v322, %v321
    %v324 = vadd.f32 %v319, %v323
    %v325 = vlaneseq
    %v326 = vshrl.u32 %v325, 7
    %v327 = vsub.s32 0, %v326
    %v328 = vrot.slane %v324, %v327
    %v329 = vmul.f32 %v328, %v40
    %v330 = vsel %vm89, %v329, 0.0
    %331 = vadd.xlane.f32.xlu0 %v330
    %v332 = vpop.xlane.xlu0 %331
    %v333 = vmul.f32 %v104, %v332
    %v334 = vmul.f32 %v108, %v332
    %v335 = vmul.f32 %v112, %v332
    %v336 = vmul.f32 %v116, %v332
    %v337 = vmul.f32 %v120, %v332
    %v338 = vmul.f32 %v124, %v332
    %v339 = vmul.f32 %v128, %v332
    %v340 = vmul.f32 %v132, %v332
    %v341 = vadd.f32 %v333, %v160
    %v342 = vadd.f32 %v334, %v164
    %v343 = vadd.f32 %v335, %v168
    %v344 = vadd.f32 %v336, %v172
    %v345 = vadd.f32 %v337, %v176
    %v346 = vadd.f32 %v338, %v180
    %v347 = vadd.f32 %v339, %v184
    %v348 = vadd.f32 %v340, %v188
    %v349 = vmax.f32 %v341, 0.0
    %v350 = vmax.f32 %v342, 0.0
    %v351 = vmax.f32 %v343, 0.0
    %v352 = vmax.f32 %v344, 0.0
    %v353 = vmax.f32 %v345, 0.0
    %v354 = vmax.f32 %v346, 0.0
    %v355 = vmax.f32 %v347, 0.0
    %v356 = vmax.f32 %v348, 0.0
    %365 = vrot.lane.b32.xlu0 %v349, 2
    %v366 = vpop.permute.xlu0 %365
    %367 = vrot.lane.b32.xlu0 %v350, 2
    %v368 = vpop.permute.xlu0 %367
    %369 = vrot.lane.b32.xlu0 %v351, 2
    %v370 = vpop.permute.xlu0 %369
    %371 = vrot.lane.b32.xlu0 %v352, 2
    %v372 = vpop.permute.xlu0 %371
    %373 = vrot.lane.b32.xlu0 %v353, 2
    %v374 = vpop.permute.xlu0 %373
    %375 = vrot.lane.b32.xlu0 %v354, 2
    %v376 = vpop.permute.xlu0 %375
    %377 = vrot.lane.b32.xlu0 %v355, 2
    %v378 = vpop.permute.xlu0 %377
    %379 = vrot.lane.b32.xlu0 %v356, 2
    %v380 = vpop.permute.xlu0 %379
    %vm389 = vcmask 21520
    %390 = vst.msk [vmem:[%s5] sm:$0x3f] %vm389, %v366
    %391 = vst.msk [vmem:[%s5 + $0x8] sm:$0x3f] %vm389, %v368
    %392 = vst.msk [vmem:[%s5 + $0x10] sm:$0x3f] %vm389, %v370
    %393 = vst.msk [vmem:[%s5 + $0x18] sm:$0x3f] %vm389, %v372
    %394 = vst.msk [vmem:[%s5 + $0x20] sm:$0x3f] %vm389, %v374
    %395 = vst.msk [vmem:[%s5 + $0x28] sm:$0x3f] %vm389, %v376
    %396 = vst.msk [vmem:[%s5 + $0x30] sm:$0x3f] %vm389, %v378
    %397 = vst.msk [vmem:[%s5 + $0x38] sm:$0x3f] %vm389, %v380
    %s398 = sld [smem:[#allocation3]]
    %v399 = vld [vmem:[%s0 + $0xf] sm:$0x1]
    %v400 = vstv %s398
    %v401 = vmul.f32 %v400, %v399
    %v402 = vadd.f32 %v70, %v401
    %s403 = sld [smem:[#allocation3 + $0x1]]
    %v404 = vld [vmem:[%s73 + $0xf] sm:$0x1]
    %v405 = vstv %s403
    %v406 = vmul.f32 %v405, %v404
    %v407 = vadd.f32 %v402, %v406
    %s408 = sld [smem:[#allocation3 + $0x2]]
    %v409 = vld [vmem:[%s79 + $0xf] sm:$0x1]
    %v410 = vstv %s408
    %v411 = vmul.f32 %v410, %v409
    %v412 = vadd.f32 %v407, %v411
    %v413 = vlaneseq
    %v414 = vshrl.u32 %v413, 7
    %v415 = vsub.s32 0, %v414
    %v416 = vrot.slane %v412, %v415
    %v417 = vmul.f32 %v416, %v40
    %v418 = vsel %vm89, %v417, 0.0
    %419 = vadd.xlane.f32.xlu0 %v418
    %v420 = vpop.xlane.xlu0 %419
    %v421 = vmul.f32 %v104, %v420
    %v422 = vmul.f32 %v108, %v420
    %v423 = vmul.f32 %v112, %v420
    %v424 = vmul.f32 %v116, %v420
    %v425 = vmul.f32 %v120, %v420
    %v426 = vmul.f32 %v124, %v420
    %v427 = vmul.f32 %v128, %v420
    %v428 = vmul.f32 %v132, %v420
    %v429 = vadd.f32 %v421, %v160
    %v430 = vadd.f32 %v422, %v164
    %v431 = vadd.f32 %v423, %v168
    %v432 = vadd.f32 %v424, %v172
    %v433 = vadd.f32 %v425, %v176
    %v434 = vadd.f32 %v426, %v180
    %v435 = vadd.f32 %v427, %v184
    %v436 = vadd.f32 %v428, %v188
    %v437 = vmax.f32 %v429, 0.0
    %v438 = vmax.f32 %v430, 0.0
    %v439 = vmax.f32 %v431, 0.0
    %v440 = vmax.f32 %v432, 0.0
    %v441 = vmax.f32 %v433, 0.0
    %v442 = vmax.f32 %v434, 0.0
    %v443 = vmax.f32 %v435, 0.0
    %v444 = vmax.f32 %v436, 0.0
    %453 = vrot.lane.b32.xlu0 %v437, 3
    %v454 = vpop.permute.xlu0 %453
    %455 = vrot.lane.b32.xlu0 %v438, 3
    %v456 = vpop.permute.xlu0 %455
    %457 = vrot.lane.b32.xlu0 %v439, 3
    %v458 = vpop.permute.xlu0 %457
    %459 = vrot.lane.b32.xlu0 %v440, 3
    %v460 = vpop.permute.xlu0 %459
    %461 = vrot.lane.b32.xlu0 %v441, 3
    %v462 = vpop.permute.xlu0 %461
    %463 = vrot.lane.b32.xlu0 %v442, 3
    %v464 = vpop.permute.xlu0 %463
    %465 = vrot.lane.b32.xlu0 %v443, 3
    %v466 = vpop.permute.xlu0 %465
    %467 = vrot.lane.b32.xlu0 %v444, 3
    %v468 = vpop.permute.xlu0 %467
    %vm477 = vcmask 29720
    %478 = vst.msk [vmem:[%s5] sm:$0x3f] %vm477, %v454
    %479 = vst.msk [vmem:[%s5 + $0x8] sm:$0x3f] %vm477, %v456
    %480 = vst.msk [vmem:[%s5 + $0x10] sm:$0x3f] %vm477, %v458
    %481 = vst.msk [vmem:[%s5 + $0x18] sm:$0x3f] %vm477, %v460
    %482 = vst.msk [vmem:[%s5 + $0x20] sm:$0x3f] %vm477, %v462
    %483 = vst.msk [vmem:[%s5 + $0x28] sm:$0x3f] %vm477, %v464
    %484 = vst.msk [vmem:[%s5 + $0x30] sm:$0x3f] %vm477, %v466
    %485 = vst.msk [vmem:[%s5 + $0x38] sm:$0x3f] %vm477, %v468
    %s486 = sld [smem:[#allocation3]]
    %v487 = vld [vmem:[%s0 + $0x14] sm:$0x1]
    %v488 = vstv %s486
    %v489 = vmul.f32 %v488, %v487
    %v490 = vadd.f32 %v70, %v489
    %s491 = sld [smem:[#allocation3 + $0x1]]
    %v492 = vld [vmem:[%s73 + $0x14] sm:$0x1]
    %v493 = vstv %s491
    %v494 = vmul.f32 %v493, %v492
    %v495 = vadd.f32 %v490, %v494
    %s496 = sld [smem:[#allocation3 + $0x2]]
    %v497 = vld [vmem:[%s79 + $0x14] sm:$0x1]
    %v498 = vstv %s496
    %v499 = vmul.f32 %v498, %v497
    %v500 = vadd.f32 %v495, %v499
    %v501 = vlaneseq
    %v502 = vshrl.u32 %v501, 7
    %v503 = vsub.s32 0, %v502
    %v504 = vrot.slane %v500, %v503
    %v505 = vmul.f32 %v504, %v40
    %v506 = vsel %vm89, %v505, 0.0
    %507 = vadd.xlane.f32.xlu0 %v506
    %v508 = vpop.xlane.xlu0 %507
    %v509 = vmul.f32 %v104, %v508
    %v510 = vmul.f32 %v108, %v508
    %v511 = vmul.f32 %v112, %v508
    %v512 = vmul.f32 %v116, %v508
    %v513 = vmul.f32 %v120, %v508
    %v514 = vmul.f32 %v124, %v508
    %v515 = vmul.f32 %v128, %v508
    %v516 = vmul.f32 %v132, %v508
    %v517 = vadd.f32 %v509, %v160
    %v518 = vadd.f32 %v510, %v164
    %v519 = vadd.f32 %v511, %v168
    %v520 = vadd.f32 %v512, %v172
    %v521 = vadd.f32 %v513, %v176
    %v522 = vadd.f32 %v514, %v180
    %v523 = vadd.f32 %v515, %v184
    %v524 = vadd.f32 %v516, %v188
    %v525 = vmax.f32 %v517, 0.0
    %v526 = vmax.f32 %v518, 0.0
    %v527 = vmax.f32 %v519, 0.0
    %v528 = vmax.f32 %v520, 0.0
    %v529 = vmax.f32 %v521, 0.0
    %v530 = vmax.f32 %v522, 0.0
    %v531 = vmax.f32 %v523, 0.0
    %v532 = vmax.f32 %v524, 0.0
    %541 = vrot.lane.b32.xlu0 %v525, 4
    %v542 = vpop.permute.xlu0 %541
    %543 = vrot.lane.b32.xlu0 %v526, 4
    %v544 = vpop.permute.xlu0 %543
    %545 = vrot.lane.b32.xlu0 %v527, 4
    %v546 = vpop.permute.xlu0 %545
    %547 = vrot.lane.b32.xlu0 %v528, 4
    %v548 = vpop.permute.xlu0 %547
    %549 = vrot.lane.b32.xlu0 %v529, 4
    %v550 = vpop.permute.xlu0 %549
    %551 = vrot.lane.b32.xlu0 %v530, 4
    %v552 = vpop.permute.xlu0 %551
    %553 = vrot.lane.b32.xlu0 %v531, 4
    %v554 = vpop.permute.xlu0 %553
    %555 = vrot.lane.b32.xlu0 %v532, 4
    %v556 = vpop.permute.xlu0 %555
    %vm565 = vcmask 37920
    %566 = vst.msk [vmem:[%s5] sm:$0x3f] %vm565, %v542
    %567 = vst.msk [vmem:[%s5 + $0x8] sm:$0x3f] %vm565, %v544
    %568 = vst.msk [vmem:[%s5 + $0x10] sm:$0x3f] %vm565, %v546
    %569 = vst.msk [vmem:[%s5 + $0x18] sm:$0x3f] %vm565, %v548
    %570 = vst.msk [vmem:[%s5 + $0x20] sm:$0x3f] %vm565, %v550
    %571 = vst.msk [vmem:[%s5 + $0x28] sm:$0x3f] %vm565, %v552
    %572 = vst.msk [vmem:[%s5 + $0x30] sm:$0x3f] %vm565, %v554
    %573 = vst.msk [vmem:[%s5 + $0x38] sm:$0x3f] %vm565, %v556
    %s574 = sld [smem:[#allocation3]]
    %v575 = vld [vmem:[%s0 + $0x19] sm:$0x1]
    %v576 = vstv %s574
    %v577 = vmul.f32 %v576, %v575
    %v578 = vadd.f32 %v70, %v577
    %s579 = sld [smem:[#allocation3 + $0x1]]
    %v580 = vld [vmem:[%s73 + $0x19] sm:$0x1]
    %v581 = vstv %s579
    %v582 = vmul.f32 %v581, %v580
    %v583 = vadd.f32 %v578, %v582
    %s584 = sld [smem:[#allocation3 + $0x2]]
    %v585 = vld [vmem:[%s79 + $0x19] sm:$0x1]
    %v586 = vstv %s584
    %v587 = vmul.f32 %v586, %v585
    %v588 = vadd.f32 %v583, %v587
    %v589 = vlaneseq
    %v590 = vshrl.u32 %v589, 7
    %v591 = vsub.s32 0, %v590
    %v592 = vrot.slane %v588, %v591
    %v593 = vmul.f32 %v592, %v40
    %v594 = vsel %vm89, %v593, 0.0
    %595 = vadd.xlane.f32.xlu0 %v594
    %v596 = vpop.xlane.xlu0 %595
    %v597 = vmul.f32 %v104, %v596
    %v598 = vmul.f32 %v108, %v596
    %v599 = vmul.f32 %v112, %v596
    %v600 = vmul.f32 %v116, %v596
    %v601 = vmul.f32 %v120, %v596
    %v602 = vmul.f32 %v124, %v596
    %v603 = vmul.f32 %v128, %v596
    %v604 = vmul.f32 %v132, %v596
    %v605 = vadd.f32 %v597, %v160
    %v606 = vadd.f32 %v598, %v164
    %v607 = vadd.f32 %v599, %v168
    %v608 = vadd.f32 %v600, %v172
    %v609 = vadd.f32 %v601, %v176
    %v610 = vadd.f32 %v602, %v180
    %v611 = vadd.f32 %v603, %v184
    %v612 = vadd.f32 %v604, %v188
    %v613 = vmax.f32 %v605, 0.0
    %v614 = vmax.f32 %v606, 0.0
    %v615 = vmax.f32 %v607, 0.0
    %v616 = vmax.f32 %v608, 0.0
    %v617 = vmax.f32 %v609, 0.0
    %v618 = vmax.f32 %v610, 0.0
    %v619 = vmax.f32 %v611, 0.0
    %v620 = vmax.f32 %v612, 0.0
    %629 = vrot.lane.b32.xlu0 %v613, 5
    %v630 = vpop.permute.xlu0 %629
    %631 = vrot.lane.b32.xlu0 %v614, 5
    %v632 = vpop.permute.xlu0 %631
    %633 = vrot.lane.b32.xlu0 %v615, 5
    %v634 = vpop.permute.xlu0 %633
    %635 = vrot.lane.b32.xlu0 %v616, 5
    %v636 = vpop.permute.xlu0 %635
    %637 = vrot.lane.b32.xlu0 %v617, 5
    %v638 = vpop.permute.xlu0 %637
    %639 = vrot.lane.b32.xlu0 %v618, 5
    %v640 = vpop.permute.xlu0 %639
    %641 = vrot.lane.b32.xlu0 %v619, 5
    %v642 = vpop.permute.xlu0 %641
    %643 = vrot.lane.b32.xlu0 %v620, 5
    %v644 = vpop.permute.xlu0 %643
    %vm653 = vcmask 46120
    %654 = vst.msk [vmem:[%s5] sm:$0x3f] %vm653, %v630
    %655 = vst.msk [vmem:[%s5 + $0x8] sm:$0x3f] %vm653, %v632
    %656 = vst.msk [vmem:[%s5 + $0x10] sm:$0x3f] %vm653, %v634
    %657 = vst.msk [vmem:[%s5 + $0x18] sm:$0x3f] %vm653, %v636
    %658 = vst.msk [vmem:[%s5 + $0x20] sm:$0x3f] %vm653, %v638
    %659 = vst.msk [vmem:[%s5 + $0x28] sm:$0x3f] %vm653, %v640
    %660 = vst.msk [vmem:[%s5 + $0x30] sm:$0x3f] %vm653, %v642
    %661 = vst.msk [vmem:[%s5 + $0x38] sm:$0x3f] %vm653, %v644
    // Predicated region
    $region26: #{model_forward.1} parent=1 // pred_check
      _
    $region27: #{model_forward.1} parent=1 // pred_check_branch
      %663 = sbr.rel (0) target = $region29
    $region28: #{model_forward.1} parent=1 // pred_region
      _
    $region29: #{model_forward.1} parent=1 // pred_fallthru
      _
    // Predicated region
    $region30: #{model_forward.1} parent=1 // pred_check
      _
    $region31: #{model_forward.1} parent=1 // pred_check_branch
      %665 = sbr.rel (0) target = $region33
    $region32: #{model_forward.1} parent=1 // pred_region
      _
    $region33: #{model_forward.1} parent=1 // pred_fallthru
      _
    %666 = vsyncpa [#allocation4], 1

</llo_original>
